<compile_context>
chip_gen: v5e
topology: v5e:2x2
jax: 0.10.0
libtpu: 0.0.40
codegen_flags: <defaults>
</compile_context>

<pallas_src>
import functools

import jax
import jax.numpy as jnp
from jax.experimental import pallas as pl
from jax.experimental.pallas import tpu as pltpu

LANE = 128
# 2048 rows amortizes per-grid-step pipeline overhead while the per-step footprint
# (~8 MiB f32) stays well inside even v5e's 16 MiB scoped-VMEM default.
DEFAULT_BATCH_TILE = 2048

# Layer widths fixed by the PyTorch module.
_F1, _F2, _F3 = 100, 80, 60   # feature trunk
_C1, _C2 = 40, 20             # class branch hiddens
_D1, _D2 = 40, 2              # domain branch hidden / head width


def _round_up(n, m):
    return ((n + m - 1) // m) * m


def _fc_fused_kernel(x_ref, w0_ref, w_ref, b_ref, out_ref, *, mxu_bf16):
    """Fused 6-matmul MLP forward for one batch tile (everything in VMEM).

    Packed layer order (all weights zero-padded to 128 lanes):
      w0_ref   : f_fc1 weight                           [n_in, 128]
      w_ref[0] : f_fc2                                  [128, 128]
      w_ref[1] : f_fc3                                  [128, 128]
      w_ref[2] : merged c_fc1 | d_fc1  (out cols 0:40 / 40:80)
      w_ref[3] : merged c_fc2 | eye(40) (d1 rides through to cols 20:60)
      w_ref[4] : merged heads  c_fc3 -> cols [0,nc), d_fc2 -> cols [nc,nc+2)
      b_ref[0..5] : matching biases, f32, [1, 128] each
    """
    mm_dtype = jnp.bfloat16 if mxu_bf16 else w0_ref.dtype

    def dense(h, w, b, *, relu):
        # MXU matmul with f32 accumulation; bias-add + ReLU stay f32 on the VPU.
        y = jnp.dot(h, w.astype(mm_dtype), preferred_element_type=jnp.float32) + b
        if relu:
            # Cast at the producer so inter-layer VMEM round-trips are bf16
            # whenever the MXU path is bf16 (halves vld/vst bytes).
            return jnp.maximum(y, 0.0).astype(mm_dtype)
        return y

    x = x_ref[...].astype(mm_dtype)
    h = dense(x, w0_ref[...], b_ref[0], relu=True)     # f_fc1: n_in -> 100
    h = dense(h, w_ref[0], b_ref[1], relu=True)        # f_fc2: 100 -> 80
    feat = dense(h, w_ref[1], b_ref[2], relu=True)     # f_fc3: 80 -> 60
    # Merged class/domain branch (ReverseLayerF = identity fwd, Dropout = eval identity):
    cd = dense(feat, w_ref[2], b_ref[3], relu=True)    # c1 -> cols 0:40, d1 -> cols 40:80
    cd = dense(cd, w_ref[3], b_ref[4], relu=True)      # c2 -> cols 0:20, d1 passthrough -> cols 20:60
    heads = dense(cd, w_ref[4], b_ref[5], relu=False)  # c_fc3 -> [0,nc), d_fc2 -> [nc,nc+2)
    out_ref[...] = heads[:, :out_ref.shape[-1]].astype(out_ref.dtype)


def _pack_params(params, n_in, n_classes, w_dtype=jnp.float32):
    """Zero-pad weights/biases to 128 lanes and pack into 3 arrays (exact)."""
    assert n_classes + _D2 <= LANE, (
        f"n_classes + 2 = {n_classes + _D2} exceeds {LANE} output lanes")
    for dim in (_F1, _F2, _F3, _C1, _C2, _D1, _D2, n_classes):
        assert dim <= LANE, f"hidden/output dim {dim} exceeds {LANE} lanes"

    expected_w = {
        "f_w1": (n_in, _F1), "f_w2": (_F1, _F2), "f_w3": (_F2, _F3),
        "c_w1": (_F3, _C1), "c_w2": (_C1, _C2), "c_w3": (_C2, n_classes),
        "d_w1": (_F3, _D1), "d_w2": (_D1, _D2),
    }
    for name, shape in expected_w.items():
        assert tuple(jnp.shape(params[name])) == shape, (name, jnp.shape(params[name]), shape)

    def pad_w(blocks, rows=LANE):
        out = jnp.zeros((rows, LANE), w_dtype)
        for w, r0, c0 in blocks:
            w = jnp.asarray(w, w_dtype)
            assert r0 + w.shape[0] <= rows and c0 + w.shape[1] <= LANE, "weight packing overflow"
            out = out.at[r0:r0 + w.shape[0], c0:c0 + w.shape[1]].set(w)
        return out

    def pad_b(blocks):
        out = jnp.zeros((1, LANE), jnp.float32)
        for b, c0 in blocks:
            b = jnp.asarray(b, jnp.float32).reshape(1, -1)
            assert c0 + b.shape[1] <= LANE, "bias packing overflow"
            out = out.at[:, c0:c0 + b.shape[1]].set(b)
        return out

    eye_d1 = jnp.eye(_D1, dtype=w_dtype)  # exact in bf16 too (1.0 is representable)

    w0 = pad_w([(params["f_w1"], 0, 0)], rows=n_in)
    w_stack = jnp.stack([
        pad_w([(params["f_w2"], 0, 0)]),
        pad_w([(params["f_w3"], 0, 0)]),
        # merged c_fc1 | d_fc1: both consume feat; disjoint output columns.
        pad_w([(params["c_w1"], 0, 0), (params["d_w1"], 0, _C1)]),
        # merged c_fc2 | identity pass-through for d1 (ReLU is a no-op on the
        # already-ReLU'd d1 columns; their bias is 0).
        pad_w([(params["c_w2"], 0, 0), (eye_d1, _C1, _C2)]),
        # merged heads: c_fc3 (rows 0:20) -> cols [0,nc); d_fc2 (rows 20:60) -> cols [nc,nc+2).
        pad_w([(params["c_w3"], 0, 0), (params["d_w2"], _C2, n_classes)]),
    ])
    b_stack = jnp.stack([
        pad_b([(params["f_b1"], 0)]),
        pad_b([(params["f_b2"], 0)]),
        pad_b([(params["f_b3"], 0)]),
        pad_b([(params["c_b1"], 0), (params["d_b1"], _C1)]),
        pad_b([(params["c_b2"], 0)]),
        pad_b([(params["c_b3"], 0), (params["d_b2"], n_classes)]),
    ])
    return w0, w_stack, b_stack


def fc_model_no_bn_forward(x, params, *, alpha=1.0, batch_tile=None,
                           use_bf16=False, mxu_bf16=True):
    """Run FCModelNoBN forward. x: [B, n_in]. Returns (class_output, domain_output)."""
    del alpha  # ReverseLayerF only scales gradients; forward is identity.
    B, n_in = x.shape
    n_classes = params["c_w3"].shape[1]
    n_out = n_classes + _D2

    if batch_tile is None:
        batch_tile = DEFAULT_BATCH_TILE
        if B >= 16:
            # Guarantee >= 2 grid steps so the "parallel" batch axis can shard
            # across v7x's 2 TensorCores and the pipeline overlaps DMA/compute.
            batch_tile = min(batch_tile, _round_up(pl.cdiv(B, 2), 8))
        batch_tile = min(batch_tile, _round_up(B, 8))
    batch_tile = max(8, _round_up(batch_tile, 8))

    grid_m = pl.cdiv(B, batch_tile)
    b_pad = grid_m * batch_tile

    store_dtype = jnp.bfloat16 if use_bf16 else jnp.float32
    w0, w_stack, b_stack = _pack_params(params, n_in, n_classes, w_dtype=store_dtype)

    x_in = x.astype(store_dtype)
    if b_pad != B:
        x_in = jnp.pad(x_in, ((0, b_pad - B), (0, 0)))  # ragged last tile -> zero rows

    # --- conservative per-step VMEM footprint --------------------------------
    xi = jnp.dtype(store_dtype).itemsize
    ai = 2 if (mxu_bf16 or use_bf16) else 4            # activation storage dtype
    est_vmem = (
        2 * batch_tile * n_in * xi                     # x tile (double-buffered)
        + 2 * batch_tile * n_out * 4                   # out tile (double-buffered)
        + 2 * (w0.size + w_stack.size) * xi            # constant weights: default 2
        + 2 * b_stack.size * 4                         #   buffers, accepted & counted
        + 6 * batch_tile * LANE * 4                    # live [TB,128] f32 intermediates
        + batch_tile * LANE * ai                       # bf16 activation copies
    )
    # Never below the 32 MiB v6e/v7x scoped default; raising to >=32 MiB also lifts
    # v5e's 16 MiB default so >=2k-row tiles compile without spills.  Cap at 48 MiB
    # to stay under v7x's 64 MiB physical VMEM.
    vmem_limit = int(min(max(2 * est_vmem, 32 << 20), 48 << 20))

    flops = 2 * B * (n_in * _F1 + _F1 * _F2 + _F2 * _F3 + _F3 * _C1 + _C1 * _C2
                     + _C2 * n_classes + _F3 * _D1 + _D1 * _D2)
    bytes_accessed = int(x_in.size * xi + b_pad * n_out * 4
                         + (w0.size + w_stack.size) * xi + b_stack.size * 4)

    kernel = functools.partial(_fc_fused_kernel, mxu_bf16=mxu_bf16)

    out = pl.pallas_call(
        kernel,
        out_shape=jax.ShapeDtypeStruct((b_pad, n_out), jnp.float32),
        grid_spec=pltpu.PrefetchScalarGridSpec(
            num_scalar_prefetch=0,
            grid=(grid_m,),
            in_specs=[
                pl.BlockSpec((batch_tile, n_in), lambda i: (i, 0)),
                # Constant weights/biases: same block every step -> DMA'd once,
                # not re-fetched across grid steps.
                pl.BlockSpec(w0.shape, lambda i: (0, 0)),
                pl.BlockSpec(w_stack.shape, lambda i: (0, 0, 0)),
                pl.BlockSpec(b_stack.shape, lambda i: (0, 0, 0)),
            ],
            # Output stays narrow ([B, nc+2]) on purpose: the masked-store cost is
            # tiny, while padding to 128 lanes would 20x the HBM writeback bytes.
            out_specs=pl.BlockSpec((batch_tile, n_out), lambda i: (i, 0)),
        ),
        compiler_params=pltpu.CompilerParams(
            dimension_semantics=("parallel",),   # batch tiles shard across v7x's 2 TCs
            vmem_limit_bytes=vmem_limit,
        ),
        cost_estimate=pl.CostEstimate(
            flops=flops, transcendentals=0, bytes_accessed=bytes_accessed),
    )(x_in, w0, w_stack, b_stack)

    class_out = out[:B, :n_classes]
    domain_out = out[:B, n_classes:]
    return class_out, domain_out


def init_params(key, n_in_features, n_out_classes=4):
    """Deterministic PyTorch-Linear-style init (uniform(-1/sqrt(fan_in), 1/sqrt(fan_in)))."""
    dims = {
        "f_1": (n_in_features, _F1),
        "f_2": (_F1, _F2),
        "f_3": (_F2, _F3),
        "c_1": (_F3, _C1),
        "c_2": (_C1, _C2),
        "c_3": (_C2, n_out_classes),
        "d_1": (_F3, _D1),
        "d_2": (_D1, _D2),
    }
    params = {}
    for name, (fan_in, fan_out) in dims.items():
        key, kw, kb = jax.random.split(key, 3)
        bound = 1.0 / jnp.sqrt(jnp.float32(fan_in))
        prefix, idx = name.split("_")
        params[f"{prefix}_w{idx}"] = jax.random.uniform(
            kw, (fan_in, fan_out), jnp.float32, -bound, bound)
        params[f"{prefix}_b{idx}"] = jax.random.uniform(
            kb, (1, fan_out), jnp.float32, -bound, bound)
    return params


def _reference_forward(x, params):
    """Pure-JAX reference for validation."""
    def lin(h, w, b):
        return h @ w + b
    relu = lambda h: jnp.maximum(h, 0.0)
    h = relu(lin(x, params["f_w1"], params["f_b1"]))
    h = relu(lin(h, params["f_w2"], params["f_b2"]))
    feat = relu(lin(h, params["f_w3"], params["f_b3"]))
    c = relu(lin(feat, params["c_w1"], params["c_b1"]))
    c = relu(lin(c, params["c_w2"], params["c_b2"]))
    c = lin(c, params["c_w3"], params["c_b3"])
    d = relu(lin(feat, params["d_w1"], params["d_b1"]))
    d = lin(d, params["d_w2"], params["d_b2"])
    return c, d


if __name__ == "__main__":
    key = jax.random.PRNGKey(0)
    k_params, k_x, k_x2 = jax.random.split(key, 3)

    batch, n_in_features, n_out_classes = 8, 32, 4
    params = init_params(k_params, n_in_features, n_out_classes)
    x = jax.random.normal(k_x, (batch, n_in_features), jnp.float32)
    ref_c, ref_d = _reference_forward(x, params)

    # Exact f32-MXU path (single tile): tight tolerance.
    c32, d32 = fc_model_no_bn_forward(x, params, alpha=1.0, mxu_bf16=False)
    jax.block_until_ready((c32, d32))
    assert c32.shape == (batch, n_out_classes) and d32.shape == (batch, 2)
    assert jnp.allclose(c32, ref_c, atol=1e-4, rtol=1e-4)
    assert jnp.allclose(d32, ref_d, atol=1e-4, rtol=1e-4)

    # Default path: bf16 MXU operands, f32 accumulation / bias-add / ReLU.
    cbf, dbf = fc_model_no_bn_forward(x, params)
    jax.block_until_ready((cbf, dbf))
    assert jnp.allclose(cbf, ref_c, atol=0.1, rtol=0.1)
    assert jnp.allclose(dbf, ref_d, atol=0.1, rtol=0.1)

    # Tiled + ragged-batch path (grid > 1, zero-padded last tile), exact path.
    batch2 = 200
    x2 = jax.random.normal(k_x2, (batch2, n_in_features), jnp.float32)
    rc2, rd2 = _reference_forward(x2, params)
    c2, d2 = fc_model_no_bn_forward(x2, params, batch_tile=64, mxu_bf16=False)
    jax.block_until_ready((c2, d2))
    assert c2.shape == (batch2, n_out_classes) and d2.shape == (batch2, 2)
    assert jnp.allclose(c2, rc2, atol=1e-4, rtol=1e-4)
    assert jnp.allclose(d2, rd2, atol=1e-4, rtol=1e-4)

    # Auto-tiling (>= 2 grid steps whenever B >= 16), default bf16-MXU path.
    c2a, d2a = fc_model_no_bn_forward(x2, params)
    jax.block_until_ready((c2a, d2a))
    assert jnp.allclose(c2a, rc2, atol=0.1, rtol=0.1)
    assert jnp.allclose(d2a, rd2, atol=0.1, rtol=0.1)

    # bf16 *storage* path (halves HBM read traffic for x / weights on v6e/v7x).
    cb, db = fc_model_no_bn_forward(x, params, use_bf16=True)
    jax.block_until_ready((cb, db))
    assert jnp.allclose(cb, ref_c, atol=0.2, rtol=0.2)
    assert jnp.allclose(db, ref_d, atol=0.2, rtol=0.2)

    print("KERNEL_OK")
</pallas_src>

<mosaic_0001>
module attributes {stable_mosaic.version = 11 : i64} {
  func.func @_fc_fused_kernel(%arg0: i32, %arg1: memref<8x32xf32, #tpu.memory_space<vmem>>, %arg2: memref<32x128xf32, #tpu.memory_space<vmem>>, %arg3: memref<5x128x128xf32, #tpu.memory_space<vmem>>, %arg4: memref<6x1x128xf32, #tpu.memory_space<vmem>>, %arg5: memref<8x6xf32, #tpu.memory_space<vmem>>) attributes {dimension_semantics = [#tpu.dimension_semantics<parallel>], iteration_bounds = array<i64: 1>, scalar_prefetch = 0 : i64, scratch_operands = 0 : i64, tpu.core_type = #tpu.core_type<tc>, window_params = [{transform_indices = @transform_0, window_bounds = array<i64: 8, 32>}, {pipeline_mode = #tpu.pipeline_mode<synchronous>, transform_indices = @transform_1, window_bounds = array<i64: 32, 128>}, {pipeline_mode = #tpu.pipeline_mode<synchronous>, transform_indices = @transform_2, window_bounds = array<i64: 5, 128, 128>}, {pipeline_mode = #tpu.pipeline_mode<synchronous>, transform_indices = @transform_3, window_bounds = array<i64: 6, 1, 128>}, {transform_indices = @transform_4, window_bounds = array<i64: 8, 6>}]} {
    %c0 = arith.constant 0 : index
    %c0_0 = arith.constant 0 : index
    %0 = vector.load %arg1[%c0, %c0_0] : memref<8x32xf32, #tpu.memory_space<vmem>>, vector<8x32xf32>
    %c0_1 = arith.constant 0 : index
    %c0_2 = arith.constant 0 : index
    %1 = vector.load %arg2[%c0_1, %c0_2] : memref<32x128xf32, #tpu.memory_space<vmem>>, vector<32x128xf32>
    %c0_3 = arith.constant 0 : index
    %c0_4 = arith.constant 0 : index
    %c0_5 = arith.constant 0 : index
    %2 = vector.load %arg4[%c0_3, %c0_4, %c0_5] : memref<6x1x128xf32, #tpu.memory_space<vmem>>, vector<1x1x128xf32>
    %3 = vector.shape_cast %2 : vector<1x1x128xf32> to vector<1x128xf32>
    %cst = arith.constant dense<0.000000e+00> : vector<8x128xf32>
    %4 = tpu.matmul %0, %1, %cst {dimension_numbers = #tpu.dot_dimension_numbers<[1], [0], [0], [1], [0, 0, 1, 1], [], []>} : vector<8x32xf32>, vector<32x128xf32>, vector<8x128xf32> -> vector<8x128xf32>
    %5 = vector.broadcast %3 : vector<1x128xf32> to vector<8x128xf32>
    %6 = arith.addf %4, %5 : vector<8x128xf32>
    %cst_6 = arith.constant 0.000000e+00 : f32
    %7 = vector.broadcast %cst_6 : f32 to vector<8x128xf32>
    %8 = arith.maximumf %6, %7 : vector<8x128xf32>
    %c0_7 = arith.constant 0 : index
    %c0_8 = arith.constant 0 : index
    %c0_9 = arith.constant 0 : index
    %9 = vector.load %arg3[%c0_7, %c0_8, %c0_9] : memref<5x128x128xf32, #tpu.memory_space<vmem>>, vector<1x128x128xf32>
    %10 = vector.shape_cast %9 : vector<1x128x128xf32> to vector<128x128xf32>
    %c1 = arith.constant 1 : index
    %c0_10 = arith.constant 0 : index
    %c0_11 = arith.constant 0 : index
    %11 = vector.load %arg4[%c1, %c0_10, %c0_11] : memref<6x1x128xf32, #tpu.memory_space<vmem>>, vector<1x1x128xf32>
    %12 = vector.shape_cast %11 : vector<1x1x128xf32> to vector<1x128xf32>
    %cst_12 = arith.constant dense<0.000000e+00> : vector<8x128xf32>
    %13 = tpu.matmul %8, %10, %cst_12 {dimension_numbers = #tpu.dot_dimension_numbers<[1], [0], [0], [1], [0, 0, 1, 1], [], []>} : vector<8x128xf32>, vector<128x128xf32>, vector<8x128xf32> -> vector<8x128xf32>
    %14 = vector.broadcast %12 : vector<1x128xf32> to vector<8x128xf32>
    %15 = arith.addf %13, %14 : vector<8x128xf32>
    %cst_13 = arith.constant 0.000000e+00 : f32
    %16 = vector.broadcast %cst_13 : f32 to vector<8x128xf32>
    %17 = arith.maximumf %15, %16 : vector<8x128xf32>
    %c1_14 = arith.constant 1 : index
    %c0_15 = arith.constant 0 : index
    %c0_16 = arith.constant 0 : index
    %18 = vector.load %arg3[%c1_14, %c0_15, %c0_16] : memref<5x128x128xf32, #tpu.memory_space<vmem>>, vector<1x128x128xf32>
    %19 = vector.shape_cast %18 : vector<1x128x128xf32> to vector<128x128xf32>
    %c2 = arith.constant 2 : index
    %c0_17 = arith.constant 0 : index
    %c0_18 = arith.constant 0 : index
    %20 = vector.load %arg4[%c2, %c0_17, %c0_18] : memref<6x1x128xf32, #tpu.memory_space<vmem>>, vector<1x1x128xf32>
    %21 = vector.shape_cast %20 : vector<1x1x128xf32> to vector<1x128xf32>
    %cst_19 = arith.constant dense<0.000000e+00> : vector<8x128xf32>
    %22 = tpu.matmul %17, %19, %cst_19 {dimension_numbers = #tpu.dot_dimension_numbers<[1], [0], [0], [1], [0, 0, 1, 1], [], []>} : vector<8x128xf32>, vector<128x128xf32>, vector<8x128xf32> -> vector<8x128xf32>
    %23 = vector.broadcast %21 : vector<1x128xf32> to vector<8x128xf32>
    %24 = arith.addf %22, %23 : vector<8x128xf32>
    %cst_20 = arith.constant 0.000000e+00 : f32
    %25 = vector.broadcast %cst_20 : f32 to vector<8x128xf32>
    %26 = arith.maximumf %24, %25 : vector<8x128xf32>
    %c2_21 = arith.constant 2 : index
    %c0_22 = arith.constant 0 : index
    %c0_23 = arith.constant 0 : index
    %27 = vector.load %arg3[%c2_21, %c0_22, %c0_23] : memref<5x128x128xf32, #tpu.memory_space<vmem>>, vector<1x128x128xf32>
    %28 = vector.shape_cast %27 : vector<1x128x128xf32> to vector<128x128xf32>
    %c3 = arith.constant 3 : index
    %c0_24 = arith.constant 0 : index
    %c0_25 = arith.constant 0 : index
    %29 = vector.load %arg4[%c3, %c0_24, %c0_25] : memref<6x1x128xf32, #tpu.memory_space<vmem>>, vector<1x1x128xf32>
    %30 = vector.shape_cast %29 : vector<1x1x128xf32> to vector<1x128xf32>
    %cst_26 = arith.constant dense<0.000000e+00> : vector<8x128xf32>
    %31 = tpu.matmul %26, %28, %cst_26 {dimension_numbers = #tpu.dot_dimension_numbers<[1], [0], [0], [1], [0, 0, 1, 1], [], []>} : vector<8x128xf32>, vector<128x128xf32>, vector<8x128xf32> -> vector<8x128xf32>
    %32 = vector.broadcast %30 : vector<1x128xf32> to vector<8x128xf32>
    %33 = arith.addf %31, %32 : vector<8x128xf32>
    %cst_27 = arith.constant 0.000000e+00 : f32
    %34 = vector.broadcast %cst_27 : f32 to vector<8x128xf32>
    %35 = arith.maximumf %33, %34 : vector<8x128xf32>
    %c3_28 = arith.constant 3 : index
    %c0_29 = arith.constant 0 : index
    %c0_30 = arith.constant 0 : index
    %36 = vector.load %arg3[%c3_28, %c0_29, %c0_30] : memref<5x128x128xf32, #tpu.memory_space<vmem>>, vector<1x128x128xf32>
    %37 = vector.shape_cast %36 : vector<1x128x128xf32> to vector<128x128xf32>
    %c4 = arith.constant 4 : index
    %c0_31 = arith.constant 0 : index
    %c0_32 = arith.constant 0 : index
    %38 = vector.load %arg4[%c4, %c0_31, %c0_32] : memref<6x1x128xf32, #tpu.memory_space<vmem>>, vector<1x1x128xf32>
    %39 = vector.shape_cast %38 : vector<1x1x128xf32> to vector<1x128xf32>
    %cst_33 = arith.constant dense<0.000000e+00> : vector<8x128xf32>
    %40 = tpu.matmul %35, %37, %cst_33 {dimension_numbers = #tpu.dot_dimension_numbers<[1], [0], [0], [1], [0, 0, 1, 1], [], []>} : vector<8x128xf32>, vector<128x128xf32>, vector<8x128xf32> -> vector<8x128xf32>
    %41 = vector.broadcast %39 : vector<1x128xf32> to vector<8x128xf32>
    %42 = arith.addf %40, %41 : vector<8x128xf32>
    %cst_34 = arith.constant 0.000000e+00 : f32
    %43 = vector.broadcast %cst_34 : f32 to vector<8x128xf32>
    %44 = arith.maximumf %42, %43 : vector<8x128xf32>
    %c4_35 = arith.constant 4 : index
    %c0_36 = arith.constant 0 : index
    %c0_37 = arith.constant 0 : index
    %45 = vector.load %arg3[%c4_35, %c0_36, %c0_37] : memref<5x128x128xf32, #tpu.memory_space<vmem>>, vector<1x128x128xf32>
    %46 = vector.shape_cast %45 : vector<1x128x128xf32> to vector<128x128xf32>
    %c5 = arith.constant 5 : index
    %c0_38 = arith.constant 0 : index
    %c0_39 = arith.constant 0 : index
    %47 = vector.load %arg4[%c5, %c0_38, %c0_39] : memref<6x1x128xf32, #tpu.memory_space<vmem>>, vector<1x1x128xf32>
    %48 = vector.shape_cast %47 : vector<1x1x128xf32> to vector<1x128xf32>
    %cst_40 = arith.constant dense<0.000000e+00> : vector<8x128xf32>
    %49 = tpu.matmul %44, %46, %cst_40 {dimension_numbers = #tpu.dot_dimension_numbers<[1], [0], [0], [1], [0, 0, 1, 1], [], []>} : vector<8x128xf32>, vector<128x128xf32>, vector<8x128xf32> -> vector<8x128xf32>
    %50 = vector.broadcast %48 : vector<1x128xf32> to vector<8x128xf32>
    %51 = arith.addf %49, %50 : vector<8x128xf32>
    %52 = vector.extract_strided_slice %51 {offsets = [0, 0], sizes = [8, 6], strides = [1, 1]} : vector<8x128xf32> to vector<8x6xf32>
    %c0_41 = arith.constant 0 : index
    %c0_42 = arith.constant 0 : index
    %53 = vector.load %arg5[%c0_41, %c0_42] : memref<8x6xf32, #tpu.memory_space<vmem>>, vector<8x6xf32>
    tpu.vector_store %arg5[%c0_41, %c0_42], %52 {strides = array<i32>} : memref<8x6xf32, #tpu.memory_space<vmem>>, vector<8x6xf32>,
    return
  }
  func.func @transform_0(%arg0: i32) -> (i32, i32) {
    %c0_i32 = arith.constant 0 : i32
    %c0_i32_0 = arith.constant 0 : i32
    return %arg0, %c0_i32 : i32, i32
  }
  func.func @transform_1(%arg0: i32) -> (i32, i32) {
    %c0_i32 = arith.constant 0 : i32
    %c0_i32_0 = arith.constant 0 : i32
    %c0_i32_1 = arith.constant 0 : i32
    return %c0_i32, %c0_i32_0 : i32, i32
  }
  func.func @transform_2(%arg0: i32) -> (i32, i32, i32) {
    %c0_i32 = arith.constant 0 : i32
    %c0_i32_0 = arith.constant 0 : i32
    %c0_i32_1 = arith.constant 0 : i32
    %c0_i32_2 = arith.constant 0 : i32
    return %c0_i32, %c0_i32_0, %c0_i32_1 : i32, i32, i32
  }
  func.func @transform_3(%arg0: i32) -> (i32, i32, i32) {
    %c0_i32 = arith.constant 0 : i32
    %c0_i32_0 = arith.constant 0 : i32
    %c0_i32_1 = arith.constant 0 : i32
    %c0_i32_2 = arith.constant 0 : i32
    return %c0_i32, %c0_i32_0, %c0_i32_1 : i32, i32, i32
  }
  func.func @transform_4(%arg0: i32) -> (i32, i32) {
    %c0_i32 = arith.constant 0 : i32
    %c0_i32_0 = arith.constant 0 : i32
    return %arg0, %c0_i32 : i32, i32
  }
}

</mosaic_0001>

<llo_original>
// kernel: tpu_custom_call.1
$region0: #{tpu_custom_call.1}
  #allocation0 [shape = 'u32[]', space=smem, size = 0x4, offset = 0x4, fixed_abs, tag = 'smem constant byte address 0x4 - core index']
  #allocation1 [shape = 'u32[72,128]{1,0:T(1,128)}', space=vmem, size = 0x9000, scoped, tag = 'internal scratch']
  %s0 = inlined_call_operand.hbm [shape: f32[8,32], index: 0, kind: input, shape index: {}]
  %s1 = inlined_call_operand.hbm [shape: f32[32,128], index: 1, kind: input, shape index: {}]
  %s2 = inlined_call_operand.hbm [shape: f32[5,128,128], index: 2, kind: input, shape index: {}]
  %s3 = inlined_call_operand.hbm [shape: f32[6,1,128], index: 3, kind: input, shape index: {}]
  %s4 = inlined_call_operand.hbm [shape: f32[8,6], index: 4, kind: output, shape index: {}]
  %s5 = sld [smem:[#allocation0]]
  $region42: #{tpu_custom_call.1} parent=0
    _
  %s7 = ssub.s32 1, %s5
  %s8 = scalar_select 0, %s7, %s5
  $region1: #{tpu_custom_call.1} parent=0
    #allocation2 [shape = 'u8[4096]{0}', space=vmem, size = 0x1000, scoped, tag = 'input window, operand 0, single buffered']
    #allocation3 [shape = 's32[1]{0}', space=sflag, size = 0x4, scoped, tag = 'scoped memory for tpu_custom_call.1']
    #allocation4 [shape = 's32[1]{0}', space=sflag, size = 0x4, scoped, tag = 'scoped memory for tpu_custom_call.1']
    #allocation5 [shape = 'u8[16384]{0}', space=vmem, size = 0x4000, scoped, tag = 'input window, operand 1, single buffered']
    #allocation6 [shape = 's32[1]{0}', space=sflag, size = 0x4, scoped, tag = 'scoped memory for tpu_custom_call.1']
    #allocation7 [shape = 'u8[327680]{0}', space=vmem, size = 0x50000, scoped, tag = 'input window, operand 2, single buffered']
    #allocation8 [shape = 'u8[3072]{0}', space=vmem, size = 0xc00, scoped, tag = 'input window, operand 3, single buffered']
    #allocation9 [shape = 's32[1]{0}', space=sflag, size = 0x4, scoped, tag = 'scoped memory for tpu_custom_call.1']
    #allocation10 [shape = 'u8[4096]{0}', space=vmem, size = 0x1000, scoped, tag = 'output window, operand 0, single buffered']
    %9 = vsyncpa [#allocation3], 0
    %10 = vsyncpa [#allocation6], 0
    %11 = vsyncpa [#allocation9], 0
    %12 = vsyncpa [#allocation4], 0
    // Predicated region
    $region2: #{tpu_custom_call.1} parent=1 // pred_check
      _
    $region3: #{tpu_custom_call.1} parent=1 // pred_check_branch
      %14 = sbr.rel (0) target = $region5
    $region4: #{tpu_custom_call.1} parent=1 // pred_region
      %16 = vsyncadd [#allocation3], 0
      %s18 = sshll.u32 %s0, 4
      %s19 = int_to_ptr.hbm [resolvable:$true] %s18
      %s20 = sshll.u32 [#allocation2], 4
      %s21 = int_to_ptr.vmem [resolvable:$true] %s20
      %23 = dma.hbm_to_vmem [thread:$0]  %s19, 128, %s21, [#allocation3]
    $region5: #{tpu_custom_call.1} parent=1 // pred_fallthru
      _
    // Predicated region
    $region6: #{tpu_custom_call.1} parent=1 // pred_check
      _
    $region7: #{tpu_custom_call.1} parent=1 // pred_check_branch
      %25 = sbr.rel (0) target = $region9
    $region8: #{tpu_custom_call.1} parent=1 // pred_region
      %27 = vsyncadd [#allocation6], 0
      %s28 = sshll.u32 %s1, 4
      %s29 = int_to_ptr.hbm [resolvable:$true] %s28
      %s30 = sshll.u32 [#allocation5], 4
      %s31 = int_to_ptr.vmem [resolvable:$true] %s30
      %36 = dma.hbm_to_vmem [thread:$0]  %s29, 512, %s31, [#allocation6], 128, 128, 8
    $region9: #{tpu_custom_call.1} parent=1 // pred_fallthru
      _
    // Predicated region
    $region10: #{tpu_custom_call.1} parent=1 // pred_check
      _
    $region11: #{tpu_custom_call.1} parent=1 // pred_check_branch
      %38 = sbr.rel (0) target = $region13
    $region12: #{tpu_custom_call.1} parent=1 // pred_region
      %40 = vsyncadd [#allocation6], 0
      %s41 = sshll.u32 %s2, 4
      %s42 = int_to_ptr.hbm [resolvable:$true] %s41
      %s43 = sshll.u32 [#allocation7], 4
      %s44 = int_to_ptr.vmem [resolvable:$true] %s43
      %49 = dma.hbm_to_vmem [thread:$0]  %s42, 10240, %s44, [#allocation6], 128, 128, 8
    $region13: #{tpu_custom_call.1} parent=1 // pred_fallthru
      _
    // Predicated region
    $region14: #{tpu_custom_call.1} parent=1 // pred_check
      _
    $region15: #{tpu_custom_call.1} parent=1 // pred_check_branch
      %51 = sbr.rel (0) target = $region17
    $region16: #{tpu_custom_call.1} parent=1 // pred_region
      %53 = vsyncadd [#allocation9], 0
      %s54 = sshll.u32 %s3, 4
      %s55 = int_to_ptr.hbm [resolvable:$true] %s54
      %s56 = sshll.u32 [#allocation8], 4
      %s57 = int_to_ptr.vmem [resolvable:$true] %s56
      %62 = dma.hbm_to_vmem [thread:$0]  %s55, 96, %s57, [#allocation9], 16, 16, 1
    $region17: #{tpu_custom_call.1} parent=1 // pred_fallthru
      _
    // Predicated region
    $region18: #{tpu_custom_call.1} parent=1 // pred_check
      _
    $region19: #{tpu_custom_call.1} parent=1 // pred_check_branch
      %64 = sbr.rel (0) target = $region21
    $region20: #{tpu_custom_call.1} parent=1 // pred_region
      %66 = dma.done [#allocation3], 128
    $region21: #{tpu_custom_call.1} parent=1 // pred_fallthru
      _
    // Predicated region
    $region22: #{tpu_custom_call.1} parent=1 // pred_check
      _
    $region23: #{tpu_custom_call.1} parent=1 // pred_check_branch
      %68 = sbr.rel (0) target = $region25
    $region24: #{tpu_custom_call.1} parent=1 // pred_region
      %70 = dma.done [#allocation6], 512
    $region25: #{tpu_custom_call.1} parent=1 // pred_fallthru
      _
    // Predicated region
    $region26: #{tpu_custom_call.1} parent=1 // pred_check
      _
    $region27: #{tpu_custom_call.1} parent=1 // pred_check_branch
      %72 = sbr.rel (0) target = $region29
    $region28: #{tpu_custom_call.1} parent=1 // pred_region
      %74 = dma.done [#allocation6], 10240
    $region29: #{tpu_custom_call.1} parent=1 // pred_fallthru
      _
    // Predicated region
    $region30: #{tpu_custom_call.1} parent=1 // pred_check
      _
    $region31: #{tpu_custom_call.1} parent=1 // pred_check_branch
      %76 = sbr.rel (0) target = $region33
    $region32: #{tpu_custom_call.1} parent=1 // pred_region
      %78 = dma.done [#allocation9], 96
    $region33: #{tpu_custom_call.1} parent=1 // pred_fallthru
      _
    %v79 = vld [vmem:[#allocation2] sm:$0xff]
    %v80 = vld [vmem:[#allocation5] sm:$0xff]
    %v81 = vld [vmem:[#allocation5 + $0x8] sm:$0xff]
    %v82 = vld [vmem:[#allocation5 + $0x10] sm:$0xff]
    %v83 = vld [vmem:[#allocation5 + $0x18] sm:$0xff]
    %v84 = vld [vmem:[#allocation8] sm:$0x1]
    %v86 = vperm.slane %v84, 0
    %vm88 = vcmask 261120
    %v90 = vsel %vm88, %v79, 0
    %92 = vmatpush.msra.mxu0 0.0
    %93 = vmatpush.msra.mxu0 0.0
    %94 = vmatpush.msra.mxu0 0.0
    %95 = vmatpush.msra.mxu0 0.0
    %96 = vmatpush.msra.mxu0 0.0
    %97 = vmatpush.msra.mxu0 0.0
    %98 = vmatpush.msra.mxu0 0.0
    %99 = vmatpush.msra.mxu0 0.0
    %100 = vmatpush.msra.mxu0 0.0
    %101 = vmatpush.msra.mxu0 0.0
    %102 = vmatpush.msra.mxu0 0.0
    %103 = vmatpush.msra.mxu0 0.0
    %104 = vmatpush.msra.mxu0 %v83
    %105 = vmatpush.msra.mxu0 %v82
    %106 = vmatpush.msra.mxu0 %v81
    %107 = vmatpush.msra.mxu0 %v80
    %108 = vmatmul.f32.gmra.mxu0 %v90
    %v109 = vpop.f32.mrf.mxu0
    %v110 = vadd.f32 %v86, %v109
    %111 = vdwg.mxu0
    %v112 = vmax.f32 %v110, 0.0
    %v113 = vld [vmem:[#allocation7] sm:$0xff]
    %v114 = vld [vmem:[#allocation7 + $0x8] sm:$0xff]
    %v115 = vld [vmem:[#allocation7 + $0x10] sm:$0xff]
    %v116 = vld [vmem:[#allocation7 + $0x18] sm:$0xff]
    %v117 = vld [vmem:[#allocation7 + $0x20] sm:$0xff]
    %v118 = vld [vmem:[#allocation7 + $0x28] sm:$0xff]
    %v119 = vld [vmem:[#allocation7 + $0x30] sm:$0xff]
    %v120 = vld [vmem:[#allocation7 + $0x38] sm:$0xff]
    %v121 = vld [vmem:[#allocation7 + $0x40] sm:$0xff]
    %v122 = vld [vmem:[#allocation7 + $0x48] sm:$0xff]
    %v123 = vld [vmem:[#allocation7 + $0x50] sm:$0xff]
    %v124 = vld [vmem:[#allocation7 + $0x58] sm:$0xff]
    %v125 = vld [vmem:[#allocation7 + $0x60] sm:$0xff]
    %v126 = vld [vmem:[#allocation7 + $0x68] sm:$0xff]
    %v127 = vld [vmem:[#allocation7 + $0x70] sm:$0xff]
    %v128 = vld [vmem:[#allocation7 + $0x78] sm:$0xff]
    %s129 = scalar_lea.vmem [#allocation8], 1
    %v130 = vld [vmem:[%s129] sm:$0x1]
    %v132 = vperm.slane %v130, 0
    %134 = vmatpush.msra.mxu0 %v128
    %135 = vmatpush.msra.mxu0 %v127
    %136 = vmatpush.msra.mxu0 %v126
    %137 = vmatpush.msra.mxu0 %v125
    %138 = vmatpush.msra.mxu0 %v124
    %139 = vmatpush.msra.mxu0 %v123
    %140 = vmatpush.msra.mxu0 %v122
    %141 = vmatpush.msra.mxu0 %v121
    %142 = vmatpush.msra.mxu0 %v120
    %143 = vmatpush.msra.mxu0 %v119
    %144 = vmatpush.msra.mxu0 %v118
    %145 = vmatpush.msra.mxu0 %v117
    %146 = vmatpush.msra.mxu0 %v116
    %147 = vmatpush.msra.mxu0 %v115
    %148 = vmatpush.msra.mxu0 %v114
    %149 = vmatpush.msra.mxu0 %v113
    %150 = vmatmul.f32.gmra.mxu0 %v112
    %v151 = vpop.f32.mrf.mxu0
    %v152 = vadd.f32 %v132, %v151
    %153 = vdwg.mxu0
    %v154 = vmax.f32 %v152, 0.0
    %s155 = scalar_lea.vmem [#allocation7], 128
    %v156 = vld [vmem:[%s155] sm:$0xff]
    %v157 = vld [vmem:[%s155 + $0x8] sm:$0xff]
    %v158 = vld [vmem:[%s155 + $0x10] sm:$0xff]
    %v159 = vld [vmem:[%s155 + $0x18] sm:$0xff]
    %v160 = vld [vmem:[%s155 + $0x20] sm:$0xff]
    %v161 = vld [vmem:[%s155 + $0x28] sm:$0xff]
    %v162 = vld [vmem:[%s155 + $0x30] sm:$0xff]
    %v163 = vld [vmem:[%s155 + $0x38] sm:$0xff]
    %v164 = vld [vmem:[%s155 + $0x40] sm:$0xff]
    %v165 = vld [vmem:[%s155 + $0x48] sm:$0xff]
    %v166 = vld [vmem:[%s155 + $0x50] sm:$0xff]
    %v167 = vld [vmem:[%s155 + $0x58] sm:$0xff]
    %v168 = vld [vmem:[%s155 + $0x60] sm:$0xff]
    %v169 = vld [vmem:[%s155 + $0x68] sm:$0xff]
    %v170 = vld [vmem:[%s155 + $0x70] sm:$0xff]
    %v171 = vld [vmem:[%s155 + $0x78] sm:$0xff]
    %s172 = scalar_lea.vmem [#allocation8], 2
    %v173 = vld [vmem:[%s172] sm:$0x1]
    %v175 = vperm.slane %v173, 0
    %177 = vmatpush.msra.mxu0 %v171
    %178 = vmatpush.msra.mxu0 %v170
    %179 = vmatpush.msra.mxu0 %v169
    %180 = vmatpush.msra.mxu0 %v168
    %181 = vmatpush.msra.mxu0 %v167
    %182 = vmatpush.msra.mxu0 %v166
    %183 = vmatpush.msra.mxu0 %v165
    %184 = vmatpush.msra.mxu0 %v164
    %185 = vmatpush.msra.mxu0 %v163
    %186 = vmatpush.msra.mxu0 %v162
    %187 = vmatpush.msra.mxu0 %v161
    %188 = vmatpush.msra.mxu0 %v160
    %189 = vmatpush.msra.mxu0 %v159
    %190 = vmatpush.msra.mxu0 %v158
    %191 = vmatpush.msra.mxu0 %v157
    %192 = vmatpush.msra.mxu0 %v156
    %193 = vmatmul.f32.gmra.mxu0 %v154
    %v194 = vpop.f32.mrf.mxu0
    %v195 = vadd.f32 %v175, %v194
    %196 = vdwg.mxu0
    %v197 = vmax.f32 %v195, 0.0
    %s198 = scalar_lea.vmem [#allocation7], 256
    %v199 = vld [vmem:[%s198] sm:$0xff]
    %v200 = vld [vmem:[%s198 + $0x8] sm:$0xff]
    %v201 = vld [vmem:[%s198 + $0x10] sm:$0xff]
    %v202 = vld [vmem:[%s198 + $0x18] sm:$0xff]
    %v203 = vld [vmem:[%s198 + $0x20] sm:$0xff]
    %v204 = vld [vmem:[%s198 + $0x28] sm:$0xff]
    %v205 = vld [vmem:[%s198 + $0x30] sm:$0xff]
    %v206 = vld [vmem:[%s198 + $0x38] sm:$0xff]
    %v207 = vld [vmem:[%s198 + $0x40] sm:$0xff]
    %v208 = vld [vmem:[%s198 + $0x48] sm:$0xff]
    %v209 = vld [vmem:[%s198 + $0x50] sm:$0xff]
    %v210 = vld [vmem:[%s198 + $0x58] sm:$0xff]
    %v211 = vld [vmem:[%s198 + $0x60] sm:$0xff]
    %v212 = vld [vmem:[%s198 + $0x68] sm:$0xff]
    %v213 = vld [vmem:[%s198 + $0x70] sm:$0xff]
    %v214 = vld [vmem:[%s198 + $0x78] sm:$0xff]
    %s215 = scalar_lea.vmem [#allocation8], 3
    %v216 = vld [vmem:[%s215] sm:$0x1]
    %v218 = vperm.slane %v216, 0
    %220 = vmatpush.msra.mxu0 %v214
    %221 = vmatpush.msra.mxu0 %v213
    %222 = vmatpush.msra.mxu0 %v212
    %223 = vmatpush.msra.mxu0 %v211
    %224 = vmatpush.msra.mxu0 %v210
    %225 = vmatpush.msra.mxu0 %v209
    %226 = vmatpush.msra.mxu0 %v208
    %227 = vmatpush.msra.mxu0 %v207
    %228 = vmatpush.msra.mxu0 %v206
    %229 = vmatpush.msra.mxu0 %v205
    %230 = vmatpush.msra.mxu0 %v204
    %231 = vmatpush.msra.mxu0 %v203
    %232 = vmatpush.msra.mxu0 %v202
    %233 = vmatpush.msra.mxu0 %v201
    %234 = vmatpush.msra.mxu0 %v200
    %235 = vmatpush.msra.mxu0 %v199
    %236 = vmatmul.f32.gmra.mxu0 %v197
    %v237 = vpop.f32.mrf.mxu0
    %v238 = vadd.f32 %v218, %v237
    %239 = vdwg.mxu0
    %v240 = vmax.f32 %v238, 0.0
    %s241 = scalar_lea.vmem [#allocation7], 384
    %v242 = vld [vmem:[%s241] sm:$0xff]
    %v243 = vld [vmem:[%s241 + $0x8] sm:$0xff]
    %v244 = vld [vmem:[%s241 + $0x10] sm:$0xff]
    %v245 = vld [vmem:[%s241 + $0x18] sm:$0xff]
    %v246 = vld [vmem:[%s241 + $0x20] sm:$0xff]
    %v247 = vld [vmem:[%s241 + $0x28] sm:$0xff]
    %v248 = vld [vmem:[%s241 + $0x30] sm:$0xff]
    %v249 = vld [vmem:[%s241 + $0x38] sm:$0xff]
    %v250 = vld [vmem:[%s241 + $0x40] sm:$0xff]
    %v251 = vld [vmem:[%s241 + $0x48] sm:$0xff]
    %v252 = vld [vmem:[%s241 + $0x50] sm:$0xff]
    %v253 = vld [vmem:[%s241 + $0x58] sm:$0xff]
    %v254 = vld [vmem:[%s241 + $0x60] sm:$0xff]
    %v255 = vld [vmem:[%s241 + $0x68] sm:$0xff]
    %v256 = vld [vmem:[%s241 + $0x70] sm:$0xff]
    %v257 = vld [vmem:[%s241 + $0x78] sm:$0xff]
    %s258 = scalar_lea.vmem [#allocation8], 4
    %v259 = vld [vmem:[%s258] sm:$0x1]
    %v261 = vperm.slane %v259, 0
    %263 = vmatpush.msra.mxu0 %v257
    %264 = vmatpush.msra.mxu0 %v256
    %265 = vmatpush.msra.mxu0 %v255
    %266 = vmatpush.msra.mxu0 %v254
    %267 = vmatpush.msra.mxu0 %v253
    %268 = vmatpush.msra.mxu0 %v252
    %269 = vmatpush.msra.mxu0 %v251
    %270 = vmatpush.msra.mxu0 %v250
    %271 = vmatpush.msra.mxu0 %v249
    %272 = vmatpush.msra.mxu0 %v248
    %273 = vmatpush.msra.mxu0 %v247
    %274 = vmatpush.msra.mxu0 %v246
    %275 = vmatpush.msra.mxu0 %v245
    %276 = vmatpush.msra.mxu0 %v244
    %277 = vmatpush.msra.mxu0 %v243
    %278 = vmatpush.msra.mxu0 %v242
    %279 = vmatmul.f32.gmra.mxu0 %v240
    %v280 = vpop.f32.mrf.mxu0
    %v281 = vadd.f32 %v261, %v280
    %282 = vdwg.mxu0
    %v283 = vmax.f32 %v281, 0.0
    %s284 = scalar_lea.vmem [#allocation7], 512
    %v285 = vld [vmem:[%s284] sm:$0xff]
    %v286 = vld [vmem:[%s284 + $0x8] sm:$0xff]
    %v287 = vld [vmem:[%s284 + $0x10] sm:$0xff]
    %v288 = vld [vmem:[%s284 + $0x18] sm:$0xff]
    %v289 = vld [vmem:[%s284 + $0x20] sm:$0xff]
    %v290 = vld [vmem:[%s284 + $0x28] sm:$0xff]
    %v291 = vld [vmem:[%s284 + $0x30] sm:$0xff]
    %v292 = vld [vmem:[%s284 + $0x38] sm:$0xff]
    %v293 = vld [vmem:[%s284 + $0x40] sm:$0xff]
    %v294 = vld [vmem:[%s284 + $0x48] sm:$0xff]
    %v295 = vld [vmem:[%s284 + $0x50] sm:$0xff]
    %v296 = vld [vmem:[%s284 + $0x58] sm:$0xff]
    %v297 = vld [vmem:[%s284 + $0x60] sm:$0xff]
    %v298 = vld [vmem:[%s284 + $0x68] sm:$0xff]
    %v299 = vld [vmem:[%s284 + $0x70] sm:$0xff]
    %v300 = vld [vmem:[%s284 + $0x78] sm:$0xff]
    %s301 = scalar_lea.vmem [#allocation8], 5
    %v302 = vld [vmem:[%s301] sm:$0x1]
    %v304 = vperm.slane %v302, 0
    %306 = vmatpush.msra.mxu0 %v300
    %307 = vmatpush.msra.mxu0 %v299
    %308 = vmatpush.msra.mxu0 %v298
    %309 = vmatpush.msra.mxu0 %v297
    %310 = vmatpush.msra.mxu0 %v296
    %311 = vmatpush.msra.mxu0 %v295
    %312 = vmatpush.msra.mxu0 %v294
    %313 = vmatpush.msra.mxu0 %v293
    %314 = vmatpush.msra.mxu0 %v292
    %315 = vmatpush.msra.mxu0 %v291
    %316 = vmatpush.msra.mxu0 %v290
    %317 = vmatpush.msra.mxu0 %v289
    %318 = vmatpush.msra.mxu0 %v288
    %319 = vmatpush.msra.mxu0 %v287
    %320 = vmatpush.msra.mxu0 %v286
    %321 = vmatpush.msra.mxu0 %v285
    %322 = vmatmul.f32.gmra.mxu0 %v283
    %v323 = vpop.f32.mrf.mxu0
    %v324 = vadd.f32 %v304, %v323
    %325 = vdwg.mxu0
    %vm326 = vcmask 48128
    %327 = vst.msk [vmem:[#allocation10] sm:$0xff] %vm326, %v324
    // Predicated region
    $region34: #{tpu_custom_call.1} parent=1 // pred_check
      _
    $region35: #{tpu_custom_call.1} parent=1 // pred_check_branch
      %329 = sbr.rel (0) target = $region37
    $region36: #{tpu_custom_call.1} parent=1 // pred_region
      %331 = vsyncadd [#allocation4], 0
      %s333 = sshll.u32 [#allocation10], 4
      %s334 = int_to_ptr.vmem [resolvable:$true] %s333
      %s335 = sshll.u32 %s4, 4
      %s336 = int_to_ptr.hbm [resolvable:$true] %s335
      %338 = dma.vmem_to_hbm [thread:$0]  %s334, 128, %s336, [#allocation4]
    $region37: #{tpu_custom_call.1} parent=1 // pred_fallthru
      _
    // Predicated region
    $region38: #{tpu_custom_call.1} parent=1 // pred_check
      _
    $region39: #{tpu_custom_call.1} parent=1 // pred_check_branch
      %340 = sbr.rel (0) target = $region41
    $region40: #{tpu_custom_call.1} parent=1 // pred_region
      %342 = dma.done [#allocation4], 128
    $region41: #{tpu_custom_call.1} parent=1 // pred_fallthru
      _
    %343 = vsyncpa [#allocation3], 1
    %344 = vsyncpa [#allocation6], 1
    %345 = vsyncpa [#allocation9], 1
    %346 = vsyncpa [#allocation4], 1

</llo_original>
